<compile_context>
chip_gen: v5e
topology: v5e:2x2
jax: 0.10.0
libtpu: 0.0.40
codegen_flags: <defaults>
</compile_context>

<pallas_src>
import functools
import math

import jax
import jax.numpy as jnp
from jax.experimental import pallas as pl
from jax.experimental.pallas import tpu as pltpu

_BF16 = jnp.bfloat16


def _round_up(x, m):
    return (x + m - 1) // m * m


def _chip_config():
    """Gate tile / VMEM heuristics on physical VMEM.

    128 MiB parts (v5e / v6e, 1 TensorCore): large tiles, high scoped limit,
    no forced small-M split.  64 MiB parts (v7x, 2 TCs): bounded windows and a
    2-way row split for small M so both cores get work."""
    vmem = 64 << 20
    try:
        info = pltpu.get_tpu_info()
        for name in ("vmem_capacity_bytes", "vmem_bytes", "vmem_size_bytes"):
            v = getattr(info, name, None)
            if isinstance(v, int) and v > 0:
                vmem = v
                break
    except Exception:
        pass
    if vmem >= (100 << 20):
        return {"vmem_limit": 96 << 20, "a_tile": 4 << 20,
                "win": 6 << 20, "split_small": False}
    return {"vmem_limit": 44 << 20, "a_tile": 2 << 20,
            "win": 3 << 20, "split_small": True}


_CFG = _chip_config()
_VMEM_LIMIT = _CFG["vmem_limit"]


def _pick_tiles(M, K, N):
    """Row padding + row tile for the fused matmul / layernorm kernels."""
    Mp = _round_up(M, 8)
    cap = max(8, min(1024, (_CFG["a_tile"] // max(2 * K, 1)) // 8 * 8))
    cap = min(cap, max(8, ((8 << 20) // max(4 * N, 1)) // 8 * 8))  # f32 acc bound
    if Mp <= cap:
        if _CFG["split_small"] and Mp >= 16:
            tm = _round_up((Mp + 1) // 2, 8)      # >=2 steps for the 2-TC chip
        else:
            tm = Mp
    else:
        tm = cap
    Mp = _round_up(Mp, tm)
    return Mp, tm


def _pick_tq(N, target=512):
    """Query tile for attention: multiple of 8 dividing N (or N when small)."""
    if N < 8 or N % 8 != 0:
        return N
    tq = max(8, min(N, target) // 8 * 8)
    while N % tq:
        tq -= 8
    return tq


def _pick_row_tile(H, W, c_win, c_acc):
    """Height tile for the windowed conv kernels (bf16 window + f32 acc budget)."""
    if W % 8 != 0:
        return H                                   # tiny maps: whole image
    budget = _CFG["win"]
    for th in range(H, 0, -1):
        if H % th:
            continue
        if (th + 2) * W * c_win * 2 <= budget and th * W * c_acc * 4 <= budget:
            return th
    return 1


# ---------------------------------------------------------------------------
# Fused matmul kernel:  out = act((LN?(A)) @ B * scale + shift) (+ residual?)
# A/B in bf16 on the MXU, f32 accumulation + epilogue, bf16 output.
# ---------------------------------------------------------------------------
@functools.lru_cache(maxsize=None)
def _matmul_call(Mp, K, N, tm, act, has_ln, has_res, out_dtype):

    def kernel(*refs):
        i = 0
        a_ref = refs[i]; i += 1
        if has_ln:
            g_ref, bb_ref = refs[i], refs[i + 1]; i += 2
        b_ref, s_ref, t_ref = refs[i], refs[i + 1], refs[i + 2]; i += 3
        if has_res:
            r_ref = refs[i]; i += 1
        o_ref = refs[i]

        a = a_ref[...]
        if has_ln:
            x = a.astype(jnp.float32)
            mu = jnp.mean(x, axis=-1, keepdims=True)
            var = jnp.mean(jnp.square(x - mu), axis=-1, keepdims=True)
            inv = jax.lax.rsqrt(var + 1e-6)          # mit LayerNorm eps = 1e-6
            a = ((x - mu) * inv * g_ref[...] + bb_ref[...]).astype(jnp.bfloat16)
        acc = jnp.dot(a, b_ref[...], preferred_element_type=jnp.float32)
        acc = acc * s_ref[...] + t_ref[...]
        if act == "relu":
            acc = jnp.maximum(acc, 0.0)
        elif act == "gelu":
            acc = jax.nn.gelu(acc, approximate=True)
        if has_res:
            acc = acc + r_ref[...].astype(jnp.float32)
        o_ref[...] = acc.astype(o_ref.dtype)

    in_specs = [pl.BlockSpec((tm, K), lambda i: (i, 0))]
    if has_ln:
        in_specs += [pl.BlockSpec((1, K), lambda i: (0, 0)),
                     pl.BlockSpec((1, K), lambda i: (0, 0))]
    in_specs += [pl.BlockSpec((K, N), lambda i: (0, 0)),
                 pl.BlockSpec((1, N), lambda i: (0, 0)),
                 pl.BlockSpec((1, N), lambda i: (0, 0))]
    if has_res:
        in_specs += [pl.BlockSpec((tm, N), lambda i: (i, 0))]

    fn = pl.pallas_call(
        kernel,
        out_shape=jax.ShapeDtypeStruct((Mp, N), jnp.dtype(out_dtype)),
        grid=(Mp // tm,),
        in_specs=in_specs,
        out_specs=pl.BlockSpec((tm, N), lambda i: (i, 0)),
        compiler_params=pltpu.CompilerParams(
            dimension_semantics=("parallel",), vmem_limit_bytes=_VMEM_LIMIT),
    )
    return jax.jit(fn)


def pallas_matmul(a, b, scale=None, shift=None, act="none",
                  ln_gamma=None, ln_beta=None, residual=None, out_dtype=_BF16):
    M, K = a.shape
    N = b.shape[1]
    Mp, tm = _pick_tiles(M, K, N)
    a = a.astype(_BF16)
    if Mp != M:
        a = jnp.pad(a, ((0, Mp - M), (0, 0)))
    args = [a]
    has_ln = ln_gamma is not None
    if has_ln:
        args += [jnp.asarray(ln_gamma, jnp.float32).reshape(1, K),
                 jnp.asarray(ln_beta, jnp.float32).reshape(1, K)]
    s = (jnp.ones((1, N), jnp.float32) if scale is None
         else jnp.asarray(scale, jnp.float32).reshape(1, N))
    t = (jnp.zeros((1, N), jnp.float32) if shift is None
         else jnp.asarray(shift, jnp.float32).reshape(1, N))
    args += [b.astype(_BF16), s, t]
    has_res = residual is not None
    if has_res:
        r = residual.astype(_BF16)
        if Mp != M:
            r = jnp.pad(r, ((0, Mp - M), (0, 0)))
        args.append(r)
    out = _matmul_call(Mp, K, N, tm, act, has_ln, has_res,
                       jnp.dtype(out_dtype).name)(*args)
    return out[:M] if Mp != M else out


# ---------------------------------------------------------------------------
# LayerNorm kernel (f32 statistics, bf16 I/O)
# ---------------------------------------------------------------------------
@functools.lru_cache(maxsize=None)
def _layernorm_call(Mp, C, tm):
    def kernel(x_ref, g_ref, b_ref, o_ref):
        x = x_ref[...].astype(jnp.float32)
        mu = jnp.mean(x, axis=-1, keepdims=True)
        var = jnp.mean(jnp.square(x - mu), axis=-1, keepdims=True)
        inv = jax.lax.rsqrt(var + 1e-6)
        o_ref[...] = ((x - mu) * inv * g_ref[...] + b_ref[...]).astype(o_ref.dtype)

    fn = pl.pallas_call(
        kernel,
        out_shape=jax.ShapeDtypeStruct((Mp, C), _BF16),
        grid=(Mp // tm,),
        in_specs=[pl.BlockSpec((tm, C), lambda i: (i, 0)),
                  pl.BlockSpec((1, C), lambda i: (0, 0)),
                  pl.BlockSpec((1, C), lambda i: (0, 0))],
        out_specs=pl.BlockSpec((tm, C), lambda i: (i, 0)),
        compiler_params=pltpu.CompilerParams(
            dimension_semantics=("parallel",), vmem_limit_bytes=_VMEM_LIMIT),
    )
    return jax.jit(fn)


def pallas_layernorm(x, gamma, beta):
    M, C = x.shape
    Mp, tm = _pick_tiles(M, C, C)
    x = x.astype(_BF16)
    if Mp != M:
        x = jnp.pad(x, ((0, Mp - M), (0, 0)))
    out = _layernorm_call(Mp, C, tm)(
        x, jnp.asarray(gamma, jnp.float32).reshape(1, C),
        jnp.asarray(beta, jnp.float32).reshape(1, C))
    return out[:M] if Mp != M else out


# ---------------------------------------------------------------------------
# Attention kernel: lane-dense (B, N, heads*d) / (B, Nk, 2*heads*d) I/O,
# heads split by static lane slices in-kernel, query-tiled grid, EUP reciprocal.
# For sr==1 the fused qkv tensor is passed twice (q/k/v at static lane offsets).
# ---------------------------------------------------------------------------
@functools.lru_cache(maxsize=None)
def _attention_call(B, N, Nk, heads, d, qsw, kvw, q_off, k_off, v_off, tq):
    D = heads * d
    scale = float(d) ** -0.5

    def kernel(q_ref, kv_ref, o_ref):
        q = q_ref[0]
        kv = kv_ref[0]
        outs = []
        for h in range(heads):
            q_h = q[:, q_off + h * d:q_off + (h + 1) * d]
            k_h = kv[:, k_off + h * d:k_off + (h + 1) * d]
            v_h = kv[:, v_off + h * d:v_off + (h + 1) * d]
            s = jax.lax.dot_general(q_h, k_h, (((1,), (1,)), ((), ())),
                                    preferred_element_type=jnp.float32) * scale
            s = s - jnp.max(s, axis=-1, keepdims=True)
            p = jnp.exp(s)
            p = p * pl.reciprocal(jnp.sum(p, axis=-1, keepdims=True), approx=True)
            outs.append(jnp.dot(p.astype(v_h.dtype), v_h,
                                preferred_element_type=jnp.float32))
        o = outs[0] if heads == 1 else jnp.concatenate(outs, axis=-1)
        o_ref[0] = o.astype(o_ref.dtype)

    fn = pl.pallas_call(
        kernel,
        out_shape=jax.ShapeDtypeStruct((B, N, D), _BF16),
        grid=(B, N // tq),
        in_specs=[pl.BlockSpec((1, tq, qsw), lambda b, i: (b, i, 0)),
                  pl.BlockSpec((1, Nk, kvw), lambda b, i: (b, 0, 0))],
        out_specs=pl.BlockSpec((1, tq, D), lambda b, i: (b, i, 0)),
        compiler_params=pltpu.CompilerParams(
            dimension_semantics=("parallel", "parallel"),
            vmem_limit_bytes=_VMEM_LIMIT),
    )
    return jax.jit(fn)


def pallas_attention(q_src, kv_src, heads, d, q_off, k_off, v_off):
    B, N, qsw = q_src.shape
    _, Nk, kvw = kv_src.shape
    tq = _pick_tq(N)
    return _attention_call(B, N, Nk, heads, d, qsw, kvw,
                           q_off, k_off, v_off, tq)(
        q_src.astype(_BF16), kv_src.astype(_BF16))


# ---------------------------------------------------------------------------
# Depthwise 3x3 conv + bias + GELU (Mix-FFN DWConv), row-tiled, width taps
# pre-concatenated so all in-kernel slices are lane-aligned.
# ---------------------------------------------------------------------------
@functools.lru_cache(maxsize=None)
def _dwconv_call(G, th, W, C):
    def kernel(x_ref, w_ref, b_ref, o_ref):
        w = w_ref[...]
        acc = jnp.zeros((th, W, C), jnp.float32)
        for kh in range(3):
            xk = x_ref[0, kh:kh + th]                       # (th, W, 3C)
            for kw in range(3):
                tap = xk[:, :, kw * C:(kw + 1) * C].astype(jnp.float32)
                wk = jax.lax.slice(w, (kh, kw, 0), (kh + 1, kw + 1, C))
                acc = acc + tap * wk
        acc = acc + b_ref[...]
        o_ref[0] = jax.nn.gelu(acc, approximate=True).astype(o_ref.dtype)

    fn = pl.pallas_call(
        kernel,
        out_shape=jax.ShapeDtypeStruct((G, th, W, C), _BF16),
        grid=(G,),
        in_specs=[pl.BlockSpec((1, th + 2, W, 3 * C), lambda g: (g, 0, 0, 0)),
                  pl.BlockSpec((3, 3, C), lambda g: (0, 0, 0)),
                  pl.BlockSpec((1, 1, C), lambda g: (0, 0, 0))],
        out_specs=pl.BlockSpec((1, th, W, C), lambda g: (g, 0, 0, 0)),
        compiler_params=pltpu.CompilerParams(
            dimension_semantics=("parallel",), vmem_limit_bytes=_VMEM_LIMIT),
    )
    return jax.jit(fn)


def pallas_dwconv3x3_gelu(x, w, b):
    B, H, W, C = x.shape
    xp = jnp.pad(x.astype(_BF16), ((0, 0), (1, 1), (1, 1), (0, 0)))
    xw = jnp.concatenate([xp[:, :, kw:kw + W, :] for kw in range(3)], axis=-1)
    th = _pick_row_tile(H, W, 3 * C, C)
    nt = H // th
    if nt == 1:
        xwin = xw                                           # (B, H+2, W, 3C)
    else:
        idx = jnp.arange(nt)[:, None] * th + jnp.arange(th + 2)[None, :]
        xwin = xw[:, idx].reshape(B * nt, th + 2, W, 3 * C)
    out = _dwconv_call(B * nt, th, W, C)(
        xwin, jnp.asarray(w, jnp.float32),
        jnp.asarray(b, jnp.float32).reshape(1, 1, C))
    return out.reshape(B, H, W, C)


# ---------------------------------------------------------------------------
# 3x3 stride-1 conv kernel (decoder / seg head):
#   width taps pre-concatenated (3x, not 9x im2col); height taps accumulated
#   in-kernel as matmuls over contiguous row windows; row-tiled grid bounds the
#   f32 accumulator and input window; folded-BN scale/shift (+ ReLU) epilogue.
# ---------------------------------------------------------------------------
@functools.lru_cache(maxsize=None)
def _conv3x3_call(G, th, W, C3, Cout, act):
    rows_in = (th + 2) * W
    rows_out = th * W

    def kernel(x_ref, w_ref, s_ref, t_ref, o_ref):
        acc = jnp.zeros((rows_out, Cout), jnp.float32)
        for kh in range(3):
            acc = acc + jnp.dot(x_ref[0, kh * W:kh * W + rows_out, :],
                                w_ref[kh],
                                preferred_element_type=jnp.float32)
        acc = acc * s_ref[...] + t_ref[...]
        if act == "relu":
            acc = jnp.maximum(acc, 0.0)
        o_ref[0] = acc.astype(o_ref.dtype)

    fn = pl.pallas_call(
        kernel,
        out_shape=jax.ShapeDtypeStruct((G, rows_out, Cout), _BF16),
        grid=(G,),
        in_specs=[pl.BlockSpec((1, rows_in, C3), lambda g: (g, 0, 0)),
                  pl.BlockSpec((3, C3, Cout), lambda g: (0, 0, 0)),
                  pl.BlockSpec((1, Cout), lambda g: (0, 0)),
                  pl.BlockSpec((1, Cout), lambda g: (0, 0))],
        out_specs=pl.BlockSpec((1, rows_out, Cout), lambda g: (g, 0, 0)),
        compiler_params=pltpu.CompilerParams(
            dimension_semantics=("parallel",), vmem_limit_bytes=_VMEM_LIMIT),
    )
    return jax.jit(fn)


def pallas_conv3x3(x, w4, scale, shift, act="none"):
    """x: (B, H, W, Cin); w4: (3, 3, Cin, Cout) with (kh, kw, cin, cout) order."""
    B, H, W, C = x.shape
    Cout = w4.shape[-1]
    C3 = 3 * C
    xp = jnp.pad(x.astype(_BF16), ((0, 0), (1, 1), (1, 1), (0, 0)))
    xw = jnp.concatenate([xp[:, :, kw:kw + W, :] for kw in range(3)], axis=-1)
    th = _pick_row_tile(H, W, C3, Cout)
    nt = H // th
    if nt == 1:
        xwin = xw.reshape(B, (H + 2) * W, C3)
    else:
        idx = jnp.arange(nt)[:, None] * th + jnp.arange(th + 2)[None, :]
        xwin = xw[:, idx].reshape(B * nt, (th + 2) * W, C3)
    wk = jnp.asarray(w4, jnp.float32).reshape(3, C3, Cout).astype(_BF16)
    s = (jnp.ones((1, Cout), jnp.float32) if scale is None
         else jnp.asarray(scale, jnp.float32).reshape(1, Cout))
    t = (jnp.zeros((1, Cout), jnp.float32) if shift is None
         else jnp.asarray(shift, jnp.float32).reshape(1, Cout))
    out = _conv3x3_call(B * nt, th, W, C3, Cout, act)(xwin, wk, s, t)
    return out.reshape(B, H, W, Cout)


# ---------------------------------------------------------------------------
# Generic conv via im2col + fused matmul (small patch-embed / SR convs only)
# TODO(synk): move the strided im2col gather into a Pallas kernel.
# ---------------------------------------------------------------------------
def conv2d_im2col(x, w, k, stride, pad, scale=None, shift=None, act="none"):
    B, H, W, C = x.shape
    x = x.astype(_BF16)
    xp = jnp.pad(x, ((0, 0), (pad, pad), (pad, pad), (0, 0))) if pad > 0 else x
    Ho = (H + 2 * pad - k) // stride + 1
    Wo = (W + 2 * pad - k) // stride + 1
    cols = [xp[:, kh:kh + stride * Ho:stride, kw:kw + stride * Wo:stride, :]
            for kh in range(k) for kw in range(k)]
    patches = jnp.concatenate(cols, axis=-1).reshape(B * Ho * Wo, k * k * C)
    out = pallas_matmul(patches, w, scale=scale, shift=shift, act=act)
    return out.reshape(B, Ho, Wo, -1), Ho, Wo


# ---------------------------------------------------------------------------
# Deterministic synthetic parameters (shapes follow smp.Unet(mit_b4, classes=11))
# ---------------------------------------------------------------------------
class _ParamGen:
    def __init__(self, seed):
        self._key = jax.random.PRNGKey(seed)
        self._i = 0

    def _next(self):
        self._i += 1
        return jax.random.fold_in(self._key, self._i)

    def matrix(self, k_in, n_out):
        return (jax.random.normal(self._next(), (k_in, n_out), jnp.float32)
                / math.sqrt(k_in))

    def conv4(self, cin, cout):
        return (jax.random.normal(self._next(), (3, 3, cin, cout), jnp.float32)
                / math.sqrt(9 * cin))

    def vector(self, n, scale=0.02):
        return jax.random.normal(self._next(), (n,), jnp.float32) * scale

    def near_one(self, n, scale=0.02):
        return 1.0 + jax.random.normal(self._next(), (n,), jnp.float32) * scale


def _bn_fold(gamma, beta, mean, var, eps=1e-5):
    s = gamma / jnp.sqrt(var + eps)
    return s, beta - mean * s


def make_params(seed=42):
    g = _ParamGen(seed)
    embed_dims = [64, 128, 320, 512]
    depths = [3, 8, 27, 3]          # mit_b4 depths
    num_heads = [1, 2, 5, 8]
    sr_ratios = [8, 4, 2, 1]
    mlp_ratio = 4
    patch_k = [7, 3, 3, 3]
    patch_s = [4, 2, 2, 2]
    patch_p = [3, 1, 1, 1]
    in_chs = [3, 64, 128, 320]

    enc = []
    for i in range(4):
        dim = embed_dims[i]
        hidden = dim * mlp_ratio
        stage = {
            "dim": dim, "heads": num_heads[i], "sr": sr_ratios[i],
            "k": patch_k[i], "s": patch_s[i], "p": patch_p[i],
            "pe_w": g.matrix(patch_k[i] * patch_k[i] * in_chs[i], dim),
            "pe_b": g.vector(dim),
            "pe_g": g.near_one(dim), "pe_bb": g.vector(dim),
            "norm_g": g.near_one(dim), "norm_b": g.vector(dim),
            "blocks": [],
        }
        for _ in range(depths[i]):
            blk = {
                "ln1_g": g.near_one(dim), "ln1_b": g.vector(dim),
                "q_w": g.matrix(dim, dim), "q_b": g.vector(dim),
                "kv_w": g.matrix(dim, 2 * dim), "kv_b": g.vector(2 * dim),
                "proj_w": g.matrix(dim, dim), "proj_b": g.vector(dim),
                "ln2_g": g.near_one(dim), "ln2_b": g.vector(dim),
                "fc1_w": g.matrix(dim, hidden), "fc1_b": g.vector(hidden),
                "dw_w": g.matrix(9, hidden).reshape(3, 3, hidden),
                "dw_b": g.vector(hidden),
                "fc2_w": g.matrix(hidden, dim), "fc2_b": g.vector(dim),
            }
            if sr_ratios[i] > 1:
                blk["sr_w"] = g.matrix(sr_ratios[i] * sr_ratios[i] * dim, dim)
                blk["sr_b"] = g.vector(dim)
                blk["sr_g"] = g.near_one(dim)
                blk["sr_bb"] = g.vector(dim)
            stage["blocks"].append(blk)
        enc.append(stage)

    # Unet decoder: in=[512,256,128,64,32], skip=[320,128,64,0,0], out=[256,128,64,32,16]
    # Output channels zero-padded to multiples of 128 for lane-dense stores; the
    # padded channels carry exact zeros, so the math is identical to the real widths.
    dec_in = [512, 256, 128, 64, 32]
    dec_skip = [320, 128, 64, 0, 0]
    dec_out = [256, 128, 64, 32, 16]
    dec_out_p = [_round_up(c, 128) for c in dec_out]       # 256,128,128,128,128

    def _pad_bn(cout, cout_p):
        s, t = _bn_fold(g.near_one(cout), g.vector(cout), g.vector(cout, 0.05),
                        1.0 + 0.1 * jnp.abs(g.vector(cout, 1.0)))
        s = jnp.pad(s, (0, cout_p - cout), constant_values=1.0)
        t = jnp.pad(t, (0, cout_p - cout))
        return s, t

    dec = []
    prev_p = dec_in[0]                                     # channels physically present
    for i in range(5):
        cout, cout_p = dec_out[i], dec_out_p[i]
        # conv1 input layout: [prev real | prev zero-pad | skip]
        parts = [g.conv4(dec_in[i], cout)]
        if prev_p > dec_in[i]:
            parts.append(jnp.zeros((3, 3, prev_p - dec_in[i], cout), jnp.float32))
        if dec_skip[i] > 0:
            parts.append(g.conv4(dec_skip[i], cout))
        w1 = jnp.concatenate(parts, axis=2)
        w1 = jnp.pad(w1, ((0, 0), (0, 0), (0, 0), (0, cout_p - cout)))
        s1, t1 = _pad_bn(cout, cout_p)
        # conv2 input layout: [cout real | zero-pad]
        w2 = g.conv4(cout, cout)
        w2 = jnp.pad(w2, ((0, 0), (0, 0), (0, cout_p - cout), (0, cout_p - cout)))
        s2, t2 = _pad_bn(cout, cout_p)
        dec.append({"c1_w": w1, "c1_s": s1, "c1_t": t1,
                    "c2_w": w2, "c2_s": s2, "c2_t": t2})
        prev_p = cout_p

    # seg head: 3x3 conv 16 -> 11, padded to 128 in / 128 out (sliced to 11 at end)
    head_w = g.conv4(16, 11)
    head_w = jnp.pad(head_w, ((0, 0), (0, 0), (0, prev_p - 16), (0, 128 - 11)))
    head_b = jnp.pad(g.vector(11), (0, 128 - 11))

    return {"enc": enc, "dec": dec, "head_w": head_w, "head_b": head_b}


# ---------------------------------------------------------------------------
# MiT-b4 encoder (SegFormer blocks) + Unet decoder + segmentation head
# ---------------------------------------------------------------------------
def _transformer_block(x, B, H, W, p, dim, heads, sr):
    N = H * W
    d = dim // heads

    # ---- attention branch (LN1 fused into q/kv projections where possible) ----
    if sr > 1:
        h = pallas_layernorm(x, p["ln1_g"], p["ln1_b"])          # needed spatially
        q = pallas_matmul(h, p["q_w"], shift=p["q_b"])
        xs, Hk, Wk = conv2d_im2col(h.reshape(B, H, W, dim), p["sr_w"], sr, sr, 0,
                                   shift=p["sr_b"])              # k == s: no blow-up
        Nk = Hk * Wk
        kv = pallas_matmul(xs.reshape(B * Nk, dim), p["kv_w"], shift=p["kv_b"],
                           ln_gamma=p["sr_g"], ln_beta=p["sr_bb"])
        o = pallas_attention(q.reshape(B, N, dim), kv.reshape(B, Nk, 2 * dim),
                             heads, d, q_off=0, k_off=0, v_off=dim)
    else:
        # sr == 1: fuse q and kv into one LN-fused matmul; attention slices
        # q/k/v out of the same qkv tensor at static lane offsets.
        qkv_w = jnp.concatenate([p["q_w"], p["kv_w"]], axis=1)
        qkv_b = jnp.concatenate([p["q_b"], p["kv_b"]])
        qkv = pallas_matmul(x, qkv_w, shift=qkv_b,
                            ln_gamma=p["ln1_g"], ln_beta=p["ln1_b"])
        qkv = qkv.reshape(B, N, 3 * dim)
        o = pallas_attention(qkv, qkv, heads, d,
                             q_off=0, k_off=dim, v_off=2 * dim)

    x = pallas_matmul(o.reshape(B * N, dim), p["proj_w"], shift=p["proj_b"],
                      residual=x)

    # ---- Mix-FFN branch (LN2 fused into fc1, residual fused into fc2) ----
    h = pallas_matmul(x, p["fc1_w"], shift=p["fc1_b"],
                      ln_gamma=p["ln2_g"], ln_beta=p["ln2_b"])
    hid = h.shape[-1]
    h = pallas_dwconv3x3_gelu(h.reshape(B, H, W, hid), p["dw_w"], p["dw_b"])
    x = pallas_matmul(h.reshape(B * H * W, hid), p["fc2_w"], shift=p["fc2_b"],
                      residual=x)
    return x


def _run_stage(x_img, sp, B):
    dim = sp["dim"]
    x_img, Ho, Wo = conv2d_im2col(x_img, sp["pe_w"], sp["k"], sp["s"], sp["p"],
                                  shift=sp["pe_b"])              # overlap patch embed
    x = pallas_layernorm(x_img.reshape(B * Ho * Wo, dim), sp["pe_g"], sp["pe_bb"])
    for bp in sp["blocks"]:
        x = _transformer_block(x, B, Ho, Wo, bp, dim, sp["heads"], sp["sr"])
    x = pallas_layernorm(x, sp["norm_g"], sp["norm_b"])
    return x.reshape(B, Ho, Wo, dim)


def _decoder_block(x, skip, p):
    # TODO(synk): fuse nearest-x2 upsample + skip concat into the conv3x3 input path.
    x = jnp.repeat(jnp.repeat(x, 2, axis=1), 2, axis=2)          # nearest x2
    if skip is not None:
        x = jnp.concatenate([x, skip.astype(_BF16)], axis=-1)
    x = pallas_conv3x3(x, p["c1_w"], p["c1_s"], p["c1_t"], act="relu")
    x = pallas_conv3x3(x, p["c2_w"], p["c2_s"], p["c2_t"], act="relu")
    return x


def mvtb4_unet_forward(x_nchw, params):
    x = jnp.transpose(x_nchw, (0, 2, 3, 1)).astype(_BF16)        # NCHW -> NHWC
    B = x.shape[0]

    feats = []
    cur = x
    for sp in params["enc"]:
        cur = _run_stage(cur, sp, B)
        feats.append(cur)
    c1, c2, c3, c4 = feats                                       # strides 4,8,16,32

    skips = [c3, c2, c1, None, None]
    d = c4
    for i, dp in enumerate(params["dec"]):
        d = _decoder_block(d, skips[i], dp)

    out = pallas_conv3x3(d, params["head_w"], None, params["head_b"], act="none")
    out = out[..., :11].astype(jnp.float32)                      # drop channel padding
    return jnp.transpose(out, (0, 3, 1, 2))                      # NHWC -> NCHW


if __name__ == "__main__":
    params = make_params(seed=42)
    x = jax.random.normal(jax.random.PRNGKey(0), (2, 3, 64, 64), jnp.float32)
    out = mvtb4_unet_forward(x, params)
    out = jax.block_until_ready(out)
    assert out.shape == (2, 11, 64, 64), out.shape
    assert bool(jnp.all(jnp.isfinite(out)))
    print("KERNEL_OK")
</pallas_src>

<mosaic_0001>
module attributes {stable_mosaic.version = 11 : i64} {
  func.func @kernel(%arg0: i32, %arg1: memref<256x147xbf16, #tpu.memory_space<vmem>>, %arg2: memref<147x64xbf16, #tpu.memory_space<vmem>>, %arg3: memref<1x64xf32, #tpu.memory_space<vmem>>, %arg4: memref<1x64xf32, #tpu.memory_space<vmem>>, %arg5: memref<256x64xbf16, #tpu.memory_space<vmem>>) attributes {dimension_semantics = [#tpu.dimension_semantics<parallel>], iteration_bounds = array<i64: 2>, scalar_prefetch = 0 : i64, scratch_operands = 0 : i64, tpu.core_type = #tpu.core_type<tc>, window_params = [{transform_indices = @transform_0, window_bounds = array<i64: 256, 147>}, {pipeline_mode = #tpu.pipeline_mode<synchronous>, transform_indices = @transform_1, window_bounds = array<i64: 147, 64>}, {pipeline_mode = #tpu.pipeline_mode<synchronous>, transform_indices = @transform_2, window_bounds = array<i64: 1, 64>}, {pipeline_mode = #tpu.pipeline_mode<synchronous>, transform_indices = @transform_3, window_bounds = array<i64: 1, 64>}, {transform_indices = @transform_4, window_bounds = array<i64: 256, 64>}]} {
    %c0 = arith.constant 0 : index
    %c0_0 = arith.constant 0 : index
    %0 = vector.load %arg1[%c0, %c0_0] : memref<256x147xbf16, #tpu.memory_space<vmem>>, vector<256x147xbf16>
    %c0_1 = arith.constant 0 : index
    %c0_2 = arith.constant 0 : index
    %1 = vector.load %arg2[%c0_1, %c0_2] : memref<147x64xbf16, #tpu.memory_space<vmem>>, vector<147x64xbf16>
    %cst = arith.constant dense<0.000000e+00> : vector<256x64xf32>
    %2 = tpu.matmul %0, %1, %cst {dimension_numbers = #tpu.dot_dimension_numbers<[1], [0], [0], [1], [0, 0, 1, 1], [], []>} : vector<256x147xbf16>, vector<147x64xbf16>, vector<256x64xf32> -> vector<256x64xf32>
    %c0_3 = arith.constant 0 : index
    %c0_4 = arith.constant 0 : index
    %3 = vector.load %arg3[%c0_3, %c0_4] : memref<1x64xf32, #tpu.memory_space<vmem>>, vector<1x64xf32>
    %4 = vector.broadcast %3 : vector<1x64xf32> to vector<256x64xf32>
    %5 = arith.mulf %2, %4 : vector<256x64xf32>
    %c0_5 = arith.constant 0 : index
    %c0_6 = arith.constant 0 : index
    %6 = vector.load %arg4[%c0_5, %c0_6] : memref<1x64xf32, #tpu.memory_space<vmem>>, vector<1x64xf32>
    %7 = vector.broadcast %6 : vector<1x64xf32> to vector<256x64xf32>
    %8 = arith.addf %5, %7 : vector<256x64xf32>
    %9 = arith.truncf %8 : vector<256x64xf32> to vector<256x64xbf16>
    %c0_7 = arith.constant 0 : index
    %c0_8 = arith.constant 0 : index
    %10 = vector.load %arg5[%c0_7, %c0_8] : memref<256x64xbf16, #tpu.memory_space<vmem>>, vector<256x64xbf16>
    tpu.vector_store %arg5[%c0_7, %c0_8], %9 {strides = array<i32>} : memref<256x64xbf16, #tpu.memory_space<vmem>>, vector<256x64xbf16>,
    return
  }
  func.func @transform_0(%arg0: i32) -> (i32, i32) {
    %c0_i32 = arith.constant 0 : i32
    %c0_i32_0 = arith.constant 0 : i32
    return %arg0, %c0_i32 : i32, i32
  }
  func.func @transform_1(%arg0: i32) -> (i32, i32) {
    %c0_i32 = arith.constant 0 : i32
    %c0_i32_0 = arith.constant 0 : i32
    %c0_i32_1 = arith.constant 0 : i32
    return %c0_i32, %c0_i32_0 : i32, i32
  }
  func.func @transform_2(%arg0: i32) -> (i32, i32) {
    %c0_i32 = arith.constant 0 : i32
    %c0_i32_0 = arith.constant 0 : i32
    %c0_i32_1 = arith.constant 0 : i32
    return %c0_i32, %c0_i32_0 : i32, i32
  }
  func.func @transform_3(%arg0: i32) -> (i32, i32) {
    %c0_i32 = arith.constant 0 : i32
    %c0_i32_0 = arith.constant 0 : i32
    %c0_i32_1 = arith.constant 0 : i32
    return %c0_i32, %c0_i32_0 : i32, i32
  }
  func.func @transform_4(%arg0: i32) -> (i32, i32) {
    %c0_i32 = arith.constant 0 : i32
    %c0_i32_0 = arith.constant 0 : i32
    return %arg0, %c0_i32 : i32, i32
  }
}

</mosaic_0001>

<llo_original>
// kernel: tpu_custom_call.1
$region0: #{tpu_custom_call.1}
  #allocation0 [shape = 'u32[]', space=smem, size = 0x4, offset = 0x4, fixed_abs, tag = 'smem constant byte address 0x4 - core index']
  #allocation1 [shape = 'u32[72,128]{1,0:T(1,128)}', space=vmem, size = 0x9000, scoped, tag = 'internal scratch']
  %s0 = inlined_call_operand.vmem [shape: bf16[512,147], index: 0, kind: input, shape index: {}]
  %s1 = inlined_call_operand.vmem [shape: bf16[147,64], index: 1, kind: input, shape index: {}]
  %s2 = inlined_call_operand.vmem [shape: f32[1,64], index: 2, kind: input, shape index: {}]
  %s3 = inlined_call_operand.vmem [shape: f32[1,64], index: 3, kind: input, shape index: {}]
  %s4 = inlined_call_operand.vmem [shape: bf16[512,64], index: 4, kind: output, shape index: {}]
  %s5 = sld [smem:[#allocation0]]
  $region49: #{tpu_custom_call.1} parent=0
    _
  %s7 = ssub.s32 1, %s5
  %s8 = scalar_select 0, %s7, %s5
  loop: start=0, step=1, limit=4
  $region2: #{tpu_custom_call.1} parent=0 // loop_pre_header
    _
  $region3: #{tpu_custom_call.1} parent=0 // loop_header
    %s10 = sphi 0, %s14
    %p11 = scmp.ge.s32.totalorder %s10, 4
    %s20 = sphi 0, %s22
    %s23 = sphi 0, %s20
    %s24 = sphi 0, %s23
    %s40 = sphi 0, %s24
    %s44 = sphi 0, %s44
    %s46 = sphi 0, %s44
    %s47 = sphi 0, %s46
    %s61 = sphi 0, %s47
    %s65 = sphi 0, %s65
    %s67 = sphi 0, %s65
    %s68 = sphi 0, %s67
    %s82 = sphi 0, %s68
    %s86 = sphi 0, %s86
    %s88 = sphi 0, %s86
    %s89 = sphi 0, %s88
    %s103 = sphi 0, %s89
    %s109 = sphi 0, %s111
    %s112 = sphi 0, %s109
    %s113 = sphi 0, %s112
    %s129 = sphi 0, %s113
  $region4: #{tpu_custom_call.1} parent=0 // loop_header_branch
    %13 = sbr.rel (%p11) target = $region8
  $region5: #{tpu_custom_call.1} parent=0 // loop_body
    %s15 = ssub.s32 %s10, 1
    %s16 = ssub.s32 %s10, 2
    %s17 = sadd.s32 %s10, 1
    %s18 = ssub.s32 %s10, %s17
    %p19 = scmp.eq.s32.totalorder %s18, 0
    %s21 = sadd.s32 %s20, 1
    %s22 = scalar_select %p19, %s20, %s21
    %p25 = pneg %p19
    %p26 = scmp.eq.s32.totalorder %s10, 1
    %p27 = por %p25, %p26
    %p28 = scmp.ne.s32.totalorder %s20, %s23
    %p29 = scmp.eq.s32.totalorder %s10, 0
    %p30 = por %p28, %p29
    %p31 = scmp.ne.s32.totalorder %s20, %s23
    %p32 = scmp.eq.s32.totalorder %s15, 1
    %p33 = por %p31, %p32
    %p34 = scmp.ne.s32.totalorder %s23, %s24
    %p35 = scmp.eq.s32.totalorder %s15, 0
    %p36 = por %p34, %p35
    %p37 = scmp.ne.s32.totalorder %s23, %s24
    %p38 = scmp.eq.s32.totalorder %s16, 1
    %p39 = por %p37, %p38
    %p41 = scmp.ne.s32.totalorder %s24, %s40
    %p42 = scmp.eq.s32.totalorder %s16, 0
    %p43 = por %p41, %p42
    %s45 = sadd.s32 %s44, 1
    %p48 = scmp.eq.s32.totalorder %s10, 1
    %p49 = scmp.ne.s32.totalorder %s44, %s46
    %p50 = scmp.eq.s32.totalorder %s10, 0
    %p51 = por %p49, %p50
    %p52 = scmp.ne.s32.totalorder %s44, %s46
    %p53 = scmp.eq.s32.totalorder %s15, 1
    %p54 = por %p52, %p53
    %p55 = scmp.ne.s32.totalorder %s46, %s47
    %p56 = scmp.eq.s32.totalorder %s15, 0
    %p57 = por %p55, %p56
    %p58 = scmp.ne.s32.totalorder %s46, %s47
    %p59 = scmp.eq.s32.totalorder %s16, 1
    %p60 = por %p58, %p59
    %p62 = scmp.ne.s32.totalorder %s47, %s61
    %p63 = scmp.eq.s32.totalorder %s16, 0
    %p64 = por %p62, %p63
    %s66 = sadd.s32 %s65, 1
    %p69 = scmp.eq.s32.totalorder %s10, 1
    %p70 = scmp.ne.s32.totalorder %s65, %s67
    %p71 = scmp.eq.s32.totalorder %s10, 0
    %p72 = por %p70, %p71
    %p73 = scmp.ne.s32.totalorder %s65, %s67
    %p74 = scmp.eq.s32.totalorder %s15, 1
    %p75 = por %p73, %p74
    %p76 = scmp.ne.s32.totalorder %s67, %s68
    %p77 = scmp.eq.s32.totalorder %s15, 0
    %p78 = por %p76, %p77
    %p79 = scmp.ne.s32.totalorder %s67, %s68
    %p80 = scmp.eq.s32.totalorder %s16, 1
    %p81 = por %p79, %p80
    %p83 = scmp.ne.s32.totalorder %s68, %s82
    %p84 = scmp.eq.s32.totalorder %s16, 0
    %p85 = por %p83, %p84
    %s87 = sadd.s32 %s86, 1
    %p90 = scmp.eq.s32.totalorder %s10, 1
    %p91 = scmp.ne.s32.totalorder %s86, %s88
    %p92 = scmp.eq.s32.totalorder %s10, 0
    %p93 = por %p91, %p92
    %p94 = scmp.ne.s32.totalorder %s86, %s88
    %p95 = scmp.eq.s32.totalorder %s15, 1
    %p96 = por %p94, %p95
    %p97 = scmp.ne.s32.totalorder %s88, %s89
    %p98 = scmp.eq.s32.totalorder %s15, 0
    %p99 = por %p97, %p98
    %p100 = scmp.ne.s32.totalorder %s88, %s89
    %p101 = scmp.eq.s32.totalorder %s16, 1
    %p102 = por %p100, %p101
    %p104 = scmp.ne.s32.totalorder %s89, %s103
    %p105 = scmp.eq.s32.totalorder %s16, 0
    %p106 = por %p104, %p105
    %s107 = ssub.s32 %s10, %s17
    %p108 = scmp.eq.s32.totalorder %s107, 0
    %s110 = sadd.s32 %s109, 1
    %s111 = scalar_select %p108, %s109, %s110
    %p114 = pneg %p108
    %p115 = scmp.eq.s32.totalorder %s10, 1
    %p116 = por %p114, %p115
    %p117 = scmp.ne.s32.totalorder %s109, %s112
    %p118 = scmp.eq.s32.totalorder %s10, 0
    %p119 = por %p117, %p118
    %p120 = scmp.ne.s32.totalorder %s109, %s112
    %p121 = scmp.eq.s32.totalorder %s15, 1
    %p122 = por %p120, %p121
    %p123 = scmp.ne.s32.totalorder %s112, %s113
    %p124 = scmp.eq.s32.totalorder %s15, 0
    %p125 = por %p123, %p124
    %p126 = scmp.ne.s32.totalorder %s112, %s113
    %p127 = scmp.eq.s32.totalorder %s16, 1
    %p128 = por %p126, %p127
    %p130 = scmp.ne.s32.totalorder %s113, %s129
    %p131 = scmp.eq.s32.totalorder %s16, 0
    %p132 = por %p130, %p131
    %p133 = scmp.le.s32.totalorder 1, %s10
    %p134 = scmp.lt.s32.totalorder %s10, 3
    %p135 = pnand %p133, %p134
    %p136 = pneg %p135
    // Predicated region
    $region9: #{tpu_custom_call.1} parent=5 // pred_check
      _
    $region10: #{tpu_custom_call.1} parent=5 // pred_check_branch
      %138 = sbr.rel (%p135) target = $region12
    $region11: #{tpu_custom_call.1} parent=5 // pred_region
      %s139 = ssub.s32 %s10, 1
      // Predicated region
      $region13: #{tpu_custom_call.1} parent=11 // pred_check
        %p140 = pneg %p57
      $region14: #{tpu_custom_call.1} parent=11 // pred_check_branch
        %142 = sbr.rel (%p140) target = $region16
      $region15: #{tpu_custom_call.1} parent=11 // pred_region
        _
      $region16: #{tpu_custom_call.1} parent=11 // pred_fallthru
        _
      // Predicated region
      $region17: #{tpu_custom_call.1} parent=11 // pred_check
        %p143 = pneg %p78
      $region18: #{tpu_custom_call.1} parent=11 // pred_check_branch
        %145 = sbr.rel (%p143) target = $region20
      $region19: #{tpu_custom_call.1} parent=11 // pred_region
        _
      $region20: #{tpu_custom_call.1} parent=11 // pred_fallthru
        _
      // Predicated region
      $region21: #{tpu_custom_call.1} parent=11 // pred_check
        %p146 = pneg %p99
      $region22: #{tpu_custom_call.1} parent=11 // pred_check_branch
        %148 = sbr.rel (%p146) target = $region24
      $region23: #{tpu_custom_call.1} parent=11 // pred_region
        _
      $region24: #{tpu_custom_call.1} parent=11 // pred_fallthru
        _
    $region12: #{tpu_custom_call.1} parent=5 // pred_fallthru
      _
    %p149 = scmp.lt.s32.totalorder %s10, 2
    // Predicated region
    $region25: #{tpu_custom_call.1} parent=5 // pred_check
      %p150 = pneg %p149
    $region26: #{tpu_custom_call.1} parent=5 // pred_check_branch
      %152 = sbr.rel (%p150) target = $region28
    $region27: #{tpu_custom_call.1} parent=5 // pred_region
      // Predicated region
      $region29: #{tpu_custom_call.1} parent=27 // pred_check
        %p153 = pneg %p30
      $region30: #{tpu_custom_call.1} parent=27 // pred_check_branch
        %155 = sbr.rel (%p153) target = $region32
      $region31: #{tpu_custom_call.1} parent=27 // pred_region
        %s156 = smul.u32 32, %s10
        %p157 = scmp.lt.s32.totalorder %s156, 63
        %s158 = scalar_select %p157, %s156, 63
        %s159 = smul.addr %s158, 2
        %s160 = smul.addr %s159, 4
        %s161 = scalar_lea.vmem %s0, %s160
        %s162 = smul.u32 32, %s10
      $region32: #{tpu_custom_call.1} parent=27 // pred_fallthru
        _
    $region28: #{tpu_custom_call.1} parent=5 // pred_fallthru
      _
    %p163 = scmp.le.s32.totalorder 1, %s10
    %p164 = scmp.lt.s32.totalorder %s10, 3
    %p165 = pnand %p163, %p164
    %p166 = pneg %p165
    // Predicated region
    $region33: #{tpu_custom_call.1} parent=5 // pred_check
      _
    $region34: #{tpu_custom_call.1} parent=5 // pred_check_branch
      %168 = sbr.rel (%p165) target = $region36
    $region35: #{tpu_custom_call.1} parent=5 // pred_region
      %s169 = ssub.s32 %s10, 1
      %s170 = smul.u32 32, %s15
      %p171 = scmp.lt.s32.totalorder %s170, 63
      %s172 = scalar_select %p171, %s170, 63
      %s173 = smul.addr %s172, 2
      %s174 = smul.addr %s173, 4
      %s175 = scalar_lea.vmem %s0, %s174
      %p176 = pneg %p36
      %p177 = pneg %p33
      %p178 = pneg %p57
      %p179 = pneg %p54
      %p180 = pneg %p78
      %p181 = pneg %p75
      %p182 = pneg %p99
      %p183 = pneg %p96
      %p184 = pneg %p125
      %p185 = pneg %p122
      %s186 = smul.u32 32, %s15
      %p187 = scmp.lt.s32.totalorder %s186, 63
      %s188 = scalar_select %p187, %s186, 63
      %s189 = smul.addr %s188, 4
      %s190 = scalar_lea.vmem %s4, %s189
      %s191 = smul.u32 32, %s15
      %p192 = scmp.lt.s32.totalorder %s191, 63
      %s193 = scalar_select %p192, %s191, 63
      %s194 = smul.addr %s193, 2
      %s195 = smul.addr %s194, 4
      %s196 = scalar_lea.vmem %s0, %s195
      %s197 = smul.u32 32, %s15
      %s198 = smul.u32 32, %s15
      %p199 = scmp.lt.s32.totalorder %s198, 63
      %s200 = scalar_select %p199, %s198, 63
      %s201 = smul.addr %s200, 4
      %s202 = scalar_lea.vmem %s4, %s201
      %s203 = smul.u32 32, %s15
      %v205 = vld [vmem:[%s196] sm:$0xff]
      %v206 = vld [vmem:[%s196 + $0x8] sm:$0xff]
      %v207 = vld [vmem:[%s196 + $0x10] sm:$0xff]
      %v208 = vld [vmem:[%s196 + $0x18] sm:$0xff]
      %v209 = vld [vmem:[%s196 + $0x20] sm:$0xff]
      %v210 = vld [vmem:[%s196 + $0x28] sm:$0xff]
      %v211 = vld [vmem:[%s196 + $0x30] sm:$0xff]
      %v212 = vld [vmem:[%s196 + $0x38] sm:$0xff]
      %v213 = vld [vmem:[%s196 + $0x40] sm:$0xff]
      %v214 = vld [vmem:[%s196 + $0x48] sm:$0xff]
      %v215 = vld [vmem:[%s196 + $0x50] sm:$0xff]
      %v216 = vld [vmem:[%s196 + $0x58] sm:$0xff]
      %v217 = vld [vmem:[%s196 + $0x60] sm:$0xff]
      %v218 = vld [vmem:[%s196 + $0x68] sm:$0xff]
      %v219 = vld [vmem:[%s196 + $0x70] sm:$0xff]
      %v220 = vld [vmem:[%s196 + $0x78] sm:$0xff]
      %v221 = vld [vmem:[%s196 + $0x80] sm:$0xff]
      %v222 = vld [vmem:[%s196 + $0x88] sm:$0xff]
      %v223 = vld [vmem:[%s196 + $0x90] sm:$0xff]
      %v224 = vld [vmem:[%s196 + $0x98] sm:$0xff]
      %v225 = vld [vmem:[%s196 + $0xa0] sm:$0xff]
      %v226 = vld [vmem:[%s196 + $0xa8] sm:$0xff]
      %v227 = vld [vmem:[%s196 + $0xb0] sm:$0xff]
      %v228 = vld [vmem:[%s196 + $0xb8] sm:$0xff]
      %v229 = vld [vmem:[%s196 + $0xc0] sm:$0xff]
      %v230 = vld [vmem:[%s196 + $0xc8] sm:$0xff]
      %v231 = vld [vmem:[%s196 + $0xd0] sm:$0xff]
      %v232 = vld [vmem:[%s196 + $0xd8] sm:$0xff]
      %v233 = vld [vmem:[%s196 + $0xe0] sm:$0xff]
      %v234 = vld [vmem:[%s196 + $0xe8] sm:$0xff]
      %v235 = vld [vmem:[%s196 + $0xf0] sm:$0xff]
      %v236 = vld [vmem:[%s196 + $0xf8] sm:$0xff]
      %v237 = vld [vmem:[%s1] sm:$0xf]
      %v238 = vld [vmem:[%s1 + $0x4] sm:$0xf]
      %v239 = vld [vmem:[%s1 + $0x8] sm:$0xf]
      %v240 = vld [vmem:[%s1 + $0xc] sm:$0xf]
      %v241 = vld [vmem:[%s1 + $0x10] sm:$0xf]
      %v242 = vld [vmem:[%s1 + $0x14] sm:$0xf]
      %v243 = vld [vmem:[%s1 + $0x18] sm:$0xf]
      %v244 = vld [vmem:[%s1 + $0x1c] sm:$0xf]
      %v245 = vld [vmem:[%s1 + $0x20] sm:$0xf]
      %v246 = vld [vmem:[%s1 + $0x24] sm:$0xf]
      %v247 = vld [vmem:[%s1 + $0x28] sm:$0xf]
      %v248 = vld [vmem:[%s1 + $0x2c] sm:$0xf]
      %v249 = vld [vmem:[%s1 + $0x30] sm:$0xf]
      %v250 = vld [vmem:[%s1 + $0x34] sm:$0xf]
      %v251 = vld [vmem:[%s1 + $0x38] sm:$0xf]
      %v252 = vld [vmem:[%s1 + $0x3c] sm:$0xf]
      %v253 = vld [vmem:[%s1 + $0x40] sm:$0xf]
      %v254 = vld [vmem:[%s1 + $0x44] sm:$0xf]
      %v255 = vld [vmem:[%s1 + $0x48] sm:$0x3]
      %v288 = vunpack.c.l.b16 %v205
      %v289 = vunpack.c.h.b16 %v205
      %v290 = vunpack.c.l.b16 %v206
      %v291 = vunpack.c.h.b16 %v206
      %v292 = vunpack.c.l.b16 %v207
      %v293 = vunpack.c.h.b16 %v207
      %v294 = vunpack.c.l.b16 %v208
      %v295 = vunpack.c.h.b16 %v208
      %v296 = vunpack.c.l.b16 %v209
      %v297 = vunpack.c.h.b16 %v209
      %v298 = vunpack.c.l.b16 %v210
      %v299 = vunpack.c.h.b16 %v210
      %v300 = vunpack.c.l.b16 %v211
      %v301 = vunpack.c.h.b16 %v211
      %v302 = vunpack.c.l.b16 %v212
      %v303 = vunpack.c.h.b16 %v212
      %v304 = vunpack.c.l.b16 %v213
      %v305 = vunpack.c.h.b16 %v213
      %v306 = vunpack.c.l.b16 %v214
      %v307 = vunpack.c.h.b16 %v214
      %v308 = vunpack.c.l.b16 %v215
      %v309 = vunpack.c.h.b16 %v215
      %v310 = vunpack.c.l.b16 %v216
      %v311 = vunpack.c.h.b16 %v216
      %v312 = vunpack.c.l.b16 %v217
      %v313 = vunpack.c.h.b16 %v217
      %v314 = vunpack.c.l.b16 %v218
      %v315 = vunpack.c.h.b16 %v218
      %v316 = vunpack.c.l.b16 %v219
      %v317 = vunpack.c.h.b16 %v219
      %v318 = vunpack.c.l.b16 %v220
      %v319 = vunpack.c.h.b16 %v220
      %v320 = vunpack.c.l.b16 %v221
      %v321 = vunpack.c.h.b16 %v221
      %v322 = vunpack.c.l.b16 %v222
      %v323 = vunpack.c.h.b16 %v222
      %v324 = vunpack.c.l.b16 %v223
      %v325 = vunpack.c.h.b16 %v223
      %v326 = vunpack.c.l.b16 %v224
      %v327 = vunpack.c.h.b16 %v224
      %v328 = vunpack.c.l.b16 %v225
      %v329 = vunpack.c.h.b16 %v225
      %v330 = vunpack.c.l.b16 %v226
      %v331 = vunpack.c.h.b16 %v226
      %v332 = vunpack.c.l.b16 %v227
      %v333 = vunpack.c.h.b16 %v227
      %v334 = vunpack.c.l.b16 %v228
      %v335 = vunpack.c.h.b16 %v228
      %v336 = vunpack.c.l.b16 %v229
      %v337 = vunpack.c.h.b16 %v229
      %v338 = vunpack.c.l.b16 %v230
      %v339 = vunpack.c.h.b16 %v230
      %v340 = vunpack.c.l.b16 %v231
      %v341 = vunpack.c.h.b16 %v231
      %v342 = vunpack.c.l.b16 %v232
      %v343 = vunpack.c.h.b16 %v232
      %v344 = vunpack.c.l.b16 %v233
      %v345 = vunpack.c.h.b16 %v233
      %v346 = vunpack.c.l.b16 %v234
      %v347 = vunpack.c.h.b16 %v234
      %v348 = vunpack.c.l.b16 %v235
      %v349 = vunpack.c.h.b16 %v235
      %v350 = vunpack.c.l.b16 %v236
      %v351 = vunpack.c.h.b16 %v236
      %v352 = vpack.c.b16 %v290, %v288
      %v353 = vpack.c.b16 %v291, %v289
      %v354 = vpack.c.b16 %v294, %v292
      %v355 = vpack.c.b16 %v295, %v293
      %v356 = vpack.c.b16 %v298, %v296
      %v357 = vpack.c.b16 %v299, %v297
      %v358 = vpack.c.b16 %v302, %v300
      %v359 = vpack.c.b16 %v303, %v301
      %v360 = vpack.c.b16 %v306, %v304
      %v361 = vpack.c.b16 %v307, %v305
      %v362 = vpack.c.b16 %v310, %v308
      %v363 = vpack.c.b16 %v311, %v309
      %v364 = vpack.c.b16 %v314, %v312
      %v365 = vpack.c.b16 %v315, %v313
      %v366 = vpack.c.b16 %v318, %v316
      %v367 = vpack.c.b16 %v319, %v317
      %v368 = vpack.c.b16 %v322, %v320
      %v369 = vpack.c.b16 %v323, %v321
      %v370 = vpack.c.b16 %v326, %v324
      %v371 = vpack.c.b16 %v327, %v325
      %v372 = vpack.c.b16 %v330, %v328
      %v373 = vpack.c.b16 %v331, %v329
      %v374 = vpack.c.b16 %v334, %v332
      %v375 = vpack.c.b16 %v335, %v333
      %v376 = vpack.c.b16 %v338, %v336
      %v377 = vpack.c.b16 %v339, %v337
      %v378 = vpack.c.b16 %v342, %v340
      %v379 = vpack.c.b16 %v343, %v341
      %v380 = vpack.c.b16 %v346, %v344
      %v381 = vpack.c.b16 %v347, %v345
      %v382 = vpack.c.b16 %v350, %v348
      %v383 = vpack.c.b16 %v351, %v349
      %v419 = vunpack.c.l.b16 %v237
      %v420 = vunpack.c.l.b16 %v238
      %v421 = vunpack.c.l.b16 %v239
      %v422 = vunpack.c.l.b16 %v240
      %v423 = vunpack.c.l.b16 %v241
      %v424 = vunpack.c.l.b16 %v242
      %v425 = vunpack.c.l.b16 %v243
      %v426 = vunpack.c.l.b16 %v244
      %v427 = vunpack.c.l.b16 %v245
      %v428 = vunpack.c.l.b16 %v246
      %v429 = vunpack.c.l.b16 %v247
      %v430 = vunpack.c.l.b16 %v248
      %v431 = vunpack.c.l.b16 %v249
      %v432 = vunpack.c.l.b16 %v250
      %v433 = vunpack.c.l.b16 %v251
      %v434 = vunpack.c.l.b16 %v252
      %v435 = vunpack.c.l.b16 %v253
      %v436 = vunpack.c.l.b16 %v254
      %v437 = vunpack.c.l.b16 %v255
      %v438 = vpack.c.b16 %v420, %v419
      %v439 = vpack.c.b16 %v422, %v421
      %v440 = vpack.c.b16 %v424, %v423
      %v441 = vpack.c.b16 %v426, %v425
      %v442 = vpack.c.b16 %v428, %v427
      %v443 = vpack.c.b16 %v430, %v429
      %v444 = vpack.c.b16 %v432, %v431
      %v445 = vpack.c.b16 %v434, %v433
      %v446 = vpack.c.b16 %v436, %v435
      %v447 = vpack.c.b16 %v437, %v437
      %vm457 = vcmask 154624
      %v459 = vsel %vm457, %v353, 0
      %v462 = vsel %vm457, %v355, 0
      %v465 = vsel %vm457, %v357, 0
      %v468 = vsel %vm457, %v359, 0
      %v471 = vsel %vm457, %v361, 0
      %v474 = vsel %vm457, %v363, 0
      %v477 = vsel %vm457, %v365, 0
      %v480 = vsel %vm457, %v367, 0
      %v483 = vsel %vm457, %v369, 0
      %v486 = vsel %vm457, %v371, 0
      %v489 = vsel %vm457, %v373, 0
      %v492 = vsel %vm457, %v375, 0
      %v495 = vsel %vm457, %v377, 0
      %v498 = vsel %vm457, %v379, 0
      %v501 = vsel %vm457, %v381, 0
      %v504 = vsel %vm457, %v383, 0
      %vm506 = vcmask 1040384
      %vm507 = vcmask 1041408
      %v508 = vsel %vm506, 4294967295, 65535
      %v509 = vsel %vm507, %v508, 0
      %v511 = vand.u32 %v447, %v509
      %513 = vmatpush.bf16.msra.mxu0 %v445
      %514 = vmatpush.bf16.msra.mxu0 %v444
      %515 = vmatpush.bf16.msra.mxu0 %v443
      %516 = vmatpush.bf16.msra.mxu0 %v442
      %517 = vmatpush.bf16.msra.mxu0 %v441
      %518 = vmatpush.bf16.msra.mxu0 %v440
      %519 = vmatpush.bf16.msra.mxu0 %v439
      %520 = vmatpush.bf16.msra.mxu0 %v438
      %521 = vmatmul.bf16.gmra.mxu0 %v352
      %v522 = vpop.f32.mrf.mxu0
      %v523 = vadd.f32 0.0, %v522
      %v524 = vpop.f32.mrf.mxu0
      %v525 = vadd.f32 0.0, %v524
      %526 = vmatmul.bf16.gmra.mxu0 %v354
      %v527 = vpop.f32.mrf.mxu0
      %v528 = vadd.f32 0.0, %v527
      %v529 = vpop.f32.mrf.mxu0
      %v530 = vadd.f32 0.0, %v529
      %531 = vmatmul.bf16.gmra.mxu0 %v356
      %v532 = vpop.f32.mrf.mxu0
      %v533 = vadd.f32 0.0, %v532
      %v534 = vpop.f32.mrf.mxu0
      %v535 = vadd.f32 0.0, %v534
      %536 = vmatmul.bf16.gmra.mxu0 %v358
      %v537 = vpop.f32.mrf.mxu0
      %v538 = vadd.f32 0.0, %v537
      %v539 = vpop.f32.mrf.mxu0
      %v540 = vadd.f32 0.0, %v539
      %541 = vmatmul.bf16.gmra.mxu0 %v360
      %v542 = vpop.f32.mrf.mxu0
      %v543 = vadd.f32 0.0, %v542
      %v544 = vpop.f32.mrf.mxu0
      %v545 = vadd.f32 0.0, %v544
      %546 = vmatmul.bf16.gmra.mxu0 %v362
      %v547 = vpop.f32.mrf.mxu0
      %v548 = vadd.f32 0.0, %v547
      %v549 = vpop.f32.mrf.mxu0
      %v550 = vadd.f32 0.0, %v549
      %551 = vmatmul.bf16.gmra.mxu0 %v364
      %v552 = vpop.f32.mrf.mxu0
      %v553 = vadd.f32 0.0, %v552
      %v554 = vpop.f32.mrf.mxu0
      %v555 = vadd.f32 0.0, %v554
      %556 = vmatmul.bf16.gmra.mxu0 %v366
      %v557 = vpop.f32.mrf.mxu0
      %v558 = vadd.f32 0.0, %v557
      %v559 = vpop.f32.mrf.mxu0
      %v560 = vadd.f32 0.0, %v559
      %561 = vmatmul.bf16.gmra.mxu0 %v368
      %v562 = vpop.f32.mrf.mxu0
      %v563 = vadd.f32 0.0, %v562
      %v564 = vpop.f32.mrf.mxu0
      %v565 = vadd.f32 0.0, %v564
      %566 = vmatmul.bf16.gmra.mxu0 %v370
      %v567 = vpop.f32.mrf.mxu0
      %v568 = vadd.f32 0.0, %v567
      %v569 = vpop.f32.mrf.mxu0
      %v570 = vadd.f32 0.0, %v569
      %571 = vmatmul.bf16.gmra.mxu0 %v372
      %v572 = vpop.f32.mrf.mxu0
      %v573 = vadd.f32 0.0, %v572
      %v574 = vpop.f32.mrf.mxu0
      %v575 = vadd.f32 0.0, %v574
      %576 = vmatmul.bf16.gmra.mxu0 %v374
      %v577 = vpop.f32.mrf.mxu0
      %v578 = vadd.f32 0.0, %v577
      %v579 = vpop.f32.mrf.mxu0
      %v580 = vadd.f32 0.0, %v579
      %581 = vmatmul.bf16.gmra.mxu0 %v376
      %v582 = vpop.f32.mrf.mxu0
      %v583 = vadd.f32 0.0, %v582
      %v584 = vpop.f32.mrf.mxu0
      %v585 = vadd.f32 0.0, %v584
      %586 = vmatmul.bf16.gmra.mxu0 %v378
      %v587 = vpop.f32.mrf.mxu0
      %v588 = vadd.f32 0.0, %v587
      %v589 = vpop.f32.mrf.mxu0
      %v590 = vadd.f32 0.0, %v589
      %591 = vmatmul.bf16.gmra.mxu0 %v380
      %v592 = vpop.f32.mrf.mxu0
      %v593 = vadd.f32 0.0, %v592
      %v594 = vpop.f32.mrf.mxu0
      %v595 = vadd.f32 0.0, %v594
      %596 = vmatmul.bf16.gmra.mxu0 %v382
      %v597 = vpop.f32.mrf.mxu0
      %v598 = vadd.f32 0.0, %v597
      %v599 = vpop.f32.mrf.mxu0
      %v600 = vadd.f32 0.0, %v599
      %601 = vdwg.mxu0
      %602 = vmatpush.bf16.msra.mxu0 0
      %603 = vmatpush.bf16.msra.mxu0 0
      %604 = vmatpush.bf16.msra.mxu0 0
      %605 = vmatpush.bf16.msra.mxu0 0
      %606 = vmatpush.bf16.msra.mxu0 0
      %607 = vmatpush.bf16.msra.mxu0 0
      %608 = vmatpush.bf16.msra.mxu0 %v511
      %609 = vmatpush.bf16.msra.mxu0 %v446
      %610 = vmatmul.bf16.gmra.mxu0 %v459
      %v611 = vpop.f32.mrf.mxu0
      %v612 = vadd.f32 %v523, %v611
      %v613 = vpop.f32.mrf.mxu0
      %v614 = vadd.f32 %v525, %v613
      %615 = vmatmul.bf16.gmra.mxu0 %v462
      %v616 = vpop.f32.mrf.mxu0
      %v617 = vadd.f32 %v528, %v616
      %v618 = vpop.f32.mrf.mxu0
      %v619 = vadd.f32 %v530, %v618
      %620 = vmatmul.bf16.gmra.mxu0 %v465
      %v621 = vpop.f32.mrf.mxu0
      %v622 = vadd.f32 %v533, %v621
      %v623 = vpop.f32.mrf.mxu0
      %v624 = vadd.f32 %v535, %v623
      %625 = vmatmul.bf16.gmra.mxu0 %v468
      %v626 = vpop.f32.mrf.mxu0
      %v627 = vadd.f32 %v538, %v626
      %v628 = vpop.f32.mrf.mxu0
      %v629 = vadd.f32 %v540, %v628
      %630 = vmatmul.bf16.gmra.mxu0 %v471
      %v631 = vpop.f32.mrf.mxu0
      %v632 = vadd.f32 %v543, %v631
      %v633 = vpop.f32.mrf.mxu0
      %v634 = vadd.f32 %v545, %v633
      %635 = vmatmul.bf16.gmra.mxu0 %v474
      %v636 = vpop.f32.mrf.mxu0
      %v637 = vadd.f32 %v548, %v636
      %v638 = vpop.f32.mrf.mxu0
      %v639 = vadd.f32 %v550, %v638
      %640 = vmatmul.bf16.gmra.mxu0 %v477
      %v641 = vpop.f32.mrf.mxu0
      %v642 = vadd.f32 %v553, %v641
      %v643 = vpop.f32.mrf.mxu0
      %v644 = vadd.f32 %v555, %v643
      %645 = vmatmul.bf16.gmra.mxu0 %v480
      %v646 = vpop.f32.mrf.mxu0
      %v647 = vadd.f32 %v558, %v646
      %v648 = vpop.f32.mrf.mxu0
      %v649 = vadd.f32 %v560, %v648
      %650 = vmatmul.bf16.gmra.mxu0 %v483
      %v651 = vpop.f32.mrf.mxu0
      %v652 = vadd.f32 %v563, %v651
      %v653 = vpop.f32.mrf.mxu0
      %v654 = vadd.f32 %v565, %v653
      %655 = vmatmul.bf16.gmra.mxu0 %v486
      %v656 = vpop.f32.mrf.mxu0
      %v657 = vadd.f32 %v568, %v656
      %v658 = vpop.f32.mrf.mxu0
      %v659 = vadd.f32 %v570, %v658
      %660 = vmatmul.bf16.gmra.mxu0 %v489
      %v661 = vpop.f32.mrf.mxu0
      %v662 = vadd.f32 %v573, %v661
      %v663 = vpop.f32.mrf.mxu0
      %v664 = vadd.f32 %v575, %v663
      %665 = vmatmul.bf16.gmra.mxu0 %v492
      %v666 = vpop.f32.mrf.mxu0
      %v667 = vadd.f32 %v578, %v666
      %v668 = vpop.f32.mrf.mxu0
      %v669 = vadd.f32 %v580, %v668
      %670 = vmatmul.bf16.gmra.mxu0 %v495
      %v671 = vpop.f32.mrf.mxu0
      %v672 = vadd.f32 %v583, %v671
      %v673 = vpop.f32.mrf.mxu0
      %v674 = vadd.f32 %v585, %v673
      %675 = vmatmul.bf16.gmra.mxu0 %v498
      %v676 = vpop.f32.mrf.mxu0
      %v677 = vadd.f32 %v588, %v676
      %v678 = vpop.f32.mrf.mxu0
      %v679 = vadd.f32 %v590, %v678
      %680 = vmatmul.bf16.gmra.mxu0 %v501
      %v681 = vpop.f32.mrf.mxu0
      %v682 = vadd.f32 %v593, %v681
      %v683 = vpop.f32.mrf.mxu0
      %v684 = vadd.f32 %v595, %v683
      %685 = vmatmul.bf16.gmra.mxu0 %v504
      %v686 = vpop.f32.mrf.mxu0
      %v687 = vadd.f32 %v598, %v686
      %v688 = vpop.f32.mrf.mxu0
      %v689 = vadd.f32 %v600, %v688
      %690 = vdwg.mxu0
      %v691 = vld [vmem:[%s2] sm:$0x1]
      %v693 = vperm.slane %v691, 0
      %v695 = vmul.f32 %v612, %v693
      %v696 = vmul.f32 %v614, %v693
      %v697 = vmul.f32 %v617, %v693
      %v698 = vmul.f32 %v619, %v693
      %v699 = vmul.f32 %v622, %v693
      %v700 = vmul.f32 %v624, %v693
      %v701 = vmul.f32 %v627, %v693
      %v702 = vmul.f32 %v629, %v693
      %v703 = vmul.f32 %v632, %v693
      %v704 = vmul.f32 %v634, %v693
      %v705 = vmul.f32 %v637, %v693
      %v706 = vmul.f32 %v639, %v693
      %v707 = vmul.f32 %v642, %v693
      %v708 = vmul.f32 %v644, %v693
      %v709 = vmul.f32 %v647, %v693
      %v710 = vmul.f32 %v649, %v693
      %v711 = vmul.f32 %v652, %v693
      %v712 = vmul.f32 %v654, %v693
      %v713 = vmul.f32 %v657, %v693
      %v714 = vmul.f32 %v659, %v693
      %v715 = vmul.f32 %v662, %v693
      %v716 = vmul.f32 %v664, %v693
      %v717 = vmul.f32 %v667, %v693
      %v718 = vmul.f32 %v669, %v693
      %v719 = vmul.f32 %v672, %v693
      %v720 = vmul.f32 %v674, %v693
      %v721 = vmul.f32 %v677, %v693
      %v722 = vmul.f32 %v679, %v693
      %v723 = vmul.f32 %v682, %v693
      %v724 = vmul.f32 %v684, %v693
      %v725 = vmul.f32 %v687, %v693
      %v726 = vmul.f32 %v689, %v693
      %v727 = vld [vmem:[%s3] sm:$0x1]
      %v729 = vperm.slane %v727, 0
      %v731 = vadd.f32 %v695, %v729
      %v732 = vadd.f32 %v696, %v729
      %v733 = vadd.f32 %v697, %v729
      %v734 = vadd.f32 %v698, %v729
      %v735 = vadd.f32 %v699, %v729
      %v736 = vadd.f32 %v700, %v729
      %v737 = vadd.f32 %v701, %v729
      %v738 = vadd.f32 %v702, %v729
      %v739 = vadd.f32 %v703, %v729
      %v740 = vadd.f32 %v704, %v729
      %v741 = vadd.f32 %v705, %v729
      %v742 = vadd.f32 %v706, %v729
      %v743 = vadd.f32 %v707, %v729
      %v744 = vadd.f32 %v708, %v729
      %v745 = vadd.f32 %v709, %v729
      %v746 = vadd.f32 %v710, %v729
      %v747 = vadd.f32 %v711, %v729
      %v748 = vadd.f32 %v712, %v729
      %v749 = vadd.f32 %v713, %v729
      %v750 = vadd.f32 %v714, %v729
      %v751 = vadd.f32 %v715, %v729
      %v752 = vadd.f32 %v716, %v729
      %v753 = vadd.f32 %v717, %v729
      %v754 = vadd.f32 %v718, %v729
      %v755 = vadd.f32 %v719, %v729
      %v756 = vadd.f32 %v720, %v729
      %v757 = vadd.f32 %v721, %v729
      %v758 = vadd.f32 %v722, %v729
      %v759 = vadd.f32 %v723, %v729
      %v760 = vadd.f32 %v724, %v729
      %v761 = vadd.f32 %v725, %v729
      %v762 = vadd.f32 %v726, %v729
      %v763 = vpack.c.bf16 %v731, %v731
      %v764 = vpack.c.bf16 %v732, %v732
      %v765 = vpack.c.bf16 %v733, %v733
      %v766 = vpack.c.bf16 %v734, %v734
      %v767 = vpack.c.bf16 %v735, %v735
      %v768 = vpack.c.bf16 %v736, %v736
      %v769 = vpack.c.bf16 %v737, %v737
      %v770 = vpack.c.bf16 %v738, %v738
      %v771 = vpack.c.bf16 %v739, %v739
      %v772 = vpack.c.bf16 %v740, %v740
      %v773 = vpack.c.bf16 %v741, %v741
      %v774 = vpack.c.bf16 %v742, %v742
      %v775 = vpack.c.bf16 %v743, %v743
      %v776 = vpack.c.bf16 %v744, %v744
      %v777 = vpack.c.bf16 %v745, %v745
      %v778 = vpack.c.bf16 %v746, %v746
      %v779 = vpack.c.bf16 %v747, %v747
      %v780 = vpack.c.bf16 %v748, %v748
      %v781 = vpack.c.bf16 %v749, %v749
      %v782 = vpack.c.bf16 %v750, %v750
      %v783 = vpack.c.bf16 %v751, %v751
      %v784 = vpack.c.bf16 %v752, %v752
      %v785 = vpack.c.bf16 %v753, %v753
      %v786 = vpack.c.bf16 %v754, %v754
      %v787 = vpack.c.bf16 %v755, %v755
      %v788 = vpack.c.bf16 %v756, %v756
      %v789 = vpack.c.bf16 %v757, %v757
      %v790 = vpack.c.bf16 %v758, %v758
      %v791 = vpack.c.bf16 %v759, %v759
      %v792 = vpack.c.bf16 %v760, %v760
      %v793 = vpack.c.bf16 %v761, %v761
      %v794 = vpack.c.bf16 %v762, %v762
      %vm795 = vcmask 519168
      %796 = vst.msk [vmem:[%s202] sm:$0xf] %vm795, %v763
      %797 = vst.msk [vmem:[%s202 + $0x4] sm:$0xf] %vm795, %v764
      %798 = vst.msk [vmem:[%s202 + $0x8] sm:$0xf] %vm795, %v765
      %799 = vst.msk [vmem:[%s202 + $0xc] sm:$0xf] %vm795, %v766
      %800 = vst.msk [vmem:[%s202 + $0x10] sm:$0xf] %vm795, %v767
      %801 = vst.msk [vmem:[%s202 + $0x14] sm:$0xf] %vm795, %v768
      %802 = vst.msk [vmem:[%s202 + $0x18] sm:$0xf] %vm795, %v769
      %803 = vst.msk [vmem:[%s202 + $0x1c] sm:$0xf] %vm795, %v770
      %804 = vst.msk [vmem:[%s202 + $0x20] sm:$0xf] %vm795, %v771
      %805 = vst.msk [vmem:[%s202 + $0x24] sm:$0xf] %vm795, %v772
      %806 = vst.msk [vmem:[%s202 + $0x28] sm:$0xf] %vm795, %v773
      %807 = vst.msk [vmem:[%s202 + $0x2c] sm:$0xf] %vm795, %v774
      %808 = vst.msk [vmem:[%s202 + $0x30] sm:$0xf] %vm795, %v775
      %809 = vst.msk [vmem:[%s202 + $0x34] sm:$0xf] %vm795, %v776
      %810 = vst.msk [vmem:[%s202 + $0x38] sm:$0xf] %vm795, %v777
      %811 = vst.msk [vmem:[%s202 + $0x3c] sm:$0xf] %vm795, %v778
      %812 = vst.msk [vmem:[%s202 + $0x40] sm:$0xf] %vm795, %v779
      %813 = vst.msk [vmem:[%s202 + $0x44] sm:$0xf] %vm795, %v780
      %814 = vst.msk [vmem:[%s202 + $0x48] sm:$0xf] %vm795, %v781
      %815 = vst.msk [vmem:[%s202 + $0x4c] sm:$0xf] %vm795, %v782
      %816 = vst.msk [vmem:[%s202 + $0x50] sm:$0xf] %vm795, %v783
      %817 = vst.msk [vmem:[%s202 + $0x54] sm:$0xf] %vm795, %v784
      %818 = vst.msk [vmem:[%s202 + $0x58] sm:$0xf] %vm795, %v785
      %819 = vst.msk [vmem:[%s202 + $0x5c] sm:$0xf] %vm795, %v786
      %820 = vst.msk [vmem:[%s202 + $0x60] sm:$0xf] %vm795, %v787
      %821 = vst.msk [vmem:[%s202 + $0x64] sm:$0xf] %vm795, %v788
      %822 = vst.msk [vmem:[%s202 + $0x68] sm:$0xf] %vm795, %v789
      %823 = vst.msk [vmem:[%s202 + $0x6c] sm:$0xf] %vm795, %v790
      %824 = vst.msk [vmem:[%s202 + $0x70] sm:$0xf] %vm795, %v791
      %825 = vst.msk [vmem:[%s202 + $0x74] sm:$0xf] %vm795, %v792
      %826 = vst.msk [vmem:[%s202 + $0x78] sm:$0xf] %vm795, %v793
      %827 = vst.msk [vmem:[%s202 + $0x7c] sm:$0xf] %vm795, %v794
      %s828 = smul.u32 32, %s15
      %p829 = scmp.lt.s32.totalorder %s828, 63
      %s830 = scalar_select %p829, %s828, 63
      %s831 = smul.addr %s830, 4
      %s832 = scalar_lea.vmem %s4, %s831
      // Predicated region
      $region37: #{tpu_custom_call.1} parent=35 // pred_check
        %p833 = pneg %p122
      $region38: #{tpu_custom_call.1} parent=35 // pred_check_branch
        %835 = sbr.rel (%p833) target = $region40
      $region39: #{tpu_custom_call.1} parent=35 // pred_region
        %s836 = smul.u32 32, %s15
      $region40: #{tpu_custom_call.1} parent=35 // pred_fallthru
        _
    $region36: #{tpu_custom_call.1} parent=5 // pred_fallthru
      _
    %p837 = scmp.le.s32.totalorder 2, %s10
    // Predicated region
    $region41: #{tpu_custom_call.1} parent=5 // pred_check
      %p838 = pneg %p837
    $region42: #{tpu_custom_call.1} parent=5 // pred_check_branch
      %840 = sbr.rel (%p838) target = $region44
    $region43: #{tpu_custom_call.1} parent=5 // pred_region
      %s841 = ssub.s32 %s10, 2
      // Predicated region
      $region45: #{tpu_custom_call.1} parent=43 // pred_check
        %p842 = pneg %p128
      $region46: #{tpu_custom_call.1} parent=43 // pred_check_branch
        %844 = sbr.rel (%p842) target = $region48
      $region47: #{tpu_custom_call.1} parent=43 // pred_region
        %s845 = smul.u32 32, %s16
        %p846 = scmp.lt.s32.totalorder %s845, 63
        %s847 = scalar_select %p846, %s845, 63
        %s848 = smul.addr %s847, 4
        %s849 = scalar_lea.vmem %s4, %s848
      $region48: #{tpu_custom_call.1} parent=43 // pred_fallthru
        _
    $region44: #{tpu_custom_call.1} parent=5 // pred_fallthru
      _
  $region6: #{tpu_custom_call.1} parent=0 // loop_footer
    %s14 = sadd.s32 1, %s10
  $region7: #{tpu_custom_call.1} parent=0 // loop_footer_branch
    %9 = sbr.rel target = $region3
  $region8: #{tpu_custom_call.1} parent=0 // loop_exit
    _

</llo_original>
